<compile_context>
chip_gen: v7x
topology: tpu7x:2x2x1
jax: 0.10.0
libtpu: 0.0.40
codegen_flags: <defaults>
</compile_context>

<pallas_src>
import jax
import jax.numpy as jnp
from jax import lax
from jax.experimental import pallas as pl
from jax.experimental.pallas import tpu as pltpu


def _round_up(a, b):
    return (a + b - 1) // b * b


def _make_chamfer_kernel(*, n_true, m_true, tn, tm, m_pad, n_chunks,
                         has_row_pad, has_col_pad):
    """Builds the kernel for one (batch, N-tile) grid point."""
    lane_groups = tm // 128    # tm is always a multiple of 128
    sub_slabs = tn // 8        # tn is always a multiple of 8

    def kernel(x_ref, y_ref, out_ref, min_x_ref, min_y_ref):
        # x_ref:     (1, C, tn)    x tile for this batch / N-tile (lanes = tn)
        # y_ref:     (1, C, m_pad) full (padded) y for this batch, resident
        # out_ref:   (1, 1, 1)     per-batch chamfer sum, accumulated over N-tiles
        # min_x_ref: (tn, 128)     VPU running min over M lane-groups (this tile)
        # min_y_ref: (8, m_pad)    VPU running min over N sublane-slabs (all tiles)
        nt = pl.program_id(1)

        @pl.when(nt == 0)
        def _init():
            out_ref[...] = jnp.zeros_like(out_ref)
            min_y_ref[...] = jnp.full_like(min_y_ref, jnp.inf)

        min_x_ref[...] = jnp.full_like(min_x_ref, jnp.inf)

        x_raw = x_ref[0]                                   # (C, tn), input dtype
        xf = x_raw.astype(jnp.float32)
        c_dim = xf.shape[0]

        # ||x_i||^2 as a (tn, 1) column via a tiny MXU matmul with a ones vector
        # (avoids a lane->sublane relayout of a row reduction).
        ones_c = jnp.ones((c_dim, 1), dtype=jnp.float32)
        xx_col = lax.dot_general(xf * xf, ones_c, (((0,), (0,)), ((), ())),
                                 preferred_element_type=jnp.float32)   # (tn, 1)

        row_valid = None
        if has_row_pad:
            row_ids = nt * tn + lax.broadcasted_iota(jnp.int32, (tn, 1), 0)
            row_valid = row_ids < n_true
            # Padded x rows -> +inf so they never win any min; masked to 0 in the sums.
            xx_col = jnp.where(row_valid, xx_col, jnp.inf)

        # Pre-scale the MXU LHS by -2 (exact) -> dot emits -2*x.y directly.
        x_mxu = x_raw * (-2.0)

        def process_chunk(j0, mask_cols):
            y_raw = y_ref[0, :, pl.ds(j0, tm)]             # (C, tm), input dtype
            yf = y_raw.astype(jnp.float32)
            yy_row = jnp.sum(yf * yf, axis=0, keepdims=True)          # (1, tm)
            if mask_cols:
                col_ids = j0 + lax.broadcasted_iota(jnp.int32, (1, tm), 1)
                yy_row = jnp.where(col_ids < m_true, yy_row, jnp.inf)
            xy2 = lax.dot_general(x_mxu, y_raw, (((0,), (0,)), ((), ())),
                                  preferred_element_type=jnp.float32)  # (tn,tm) = -2x.y
            d = (xx_col + yy_row) + xy2                    # no full-tile mask / clamp

            # x-side: fold tm/128 lane-groups with VPU minimum into (tn, 128).
            acc_x = min_x_ref[...]
            for g in range(lane_groups):
                acc_x = jnp.minimum(acc_x, d[:, g * 128:(g + 1) * 128])
            min_x_ref[...] = acc_x

            # y-side: fold tn/8 sublane-slabs with VPU minimum into (8, tm).
            acc_y = min_y_ref[:, pl.ds(j0, tm)]
            for s in range(sub_slabs):
                acc_y = jnp.minimum(acc_y, d[s * 8:(s + 1) * 8, :])
            min_y_ref[:, pl.ds(j0, tm)] = acc_y

        def run_chunks(lo, hi, mask_cols):
            count = hi - lo
            if count <= 0:
                return
            if count == 1:
                process_chunk(lo * tm, mask_cols)          # static offset
            else:
                def body(c, carry):
                    process_chunk(pl.multiple_of(c * tm, tm), mask_cols)
                    return carry
                lax.fori_loop(lo, hi, body, 0, unroll=2)

        if has_col_pad:
            run_chunks(0, n_chunks - 1, False)        # interior chunks: no mask at all
            run_chunks(n_chunks - 1, n_chunks, True)  # only the tail chunk masks yy_row
        else:
            run_chunks(0, n_chunks, False)

        # x-side contribution of this tile: one cross-lane reduce per tile; the
        # cancellation clamp is applied on the reduced (tn,1) vector (commutes with min).
        row_min = jnp.min(min_x_ref[...], axis=1, keepdims=True)      # (tn, 1)
        row_min = jnp.maximum(row_min, 0.0)
        if has_row_pad:
            row_min = jnp.where(row_valid, row_min, 0.0)
        out_ref[...] = out_ref[...] + jnp.sum(row_min)

        @pl.when(nt == pl.num_programs(1) - 1)
        def _finalize():
            min_y = jnp.min(min_y_ref[...], axis=0, keepdims=True)    # (1, m_pad), 8->1
            min_y = jnp.maximum(min_y, 0.0)
            if has_col_pad:
                cols = lax.broadcasted_iota(jnp.int32, (1, m_pad), 1)
                min_y = jnp.where(cols < m_true, min_y, 0.0)
            out_ref[...] = out_ref[...] + jnp.sum(min_y)

    return kernel


def chamfer_distance(x, y, *, tn_target=512, tm_target=512,
                     vmem_limit_bytes=32 * 1024 * 1024):
    """x: (B, C, N), y: (B, C, M) -> scalar (mean over batch).

    Defaults are sized for v7x's 64 MiB VMEM; on v5e/v6e (128 MiB) larger
    tn_target/tm_target (e.g. 512/1024-2048) and a higher vmem_limit_bytes can
    be swept for fewer grid steps.
    """
    B, C, N = x.shape
    By, Cy, M = y.shape
    assert B == By and C == Cy
    assert tn_target % 128 == 0 and tm_target % 128 == 0

    # N tiling (grid axis). tn is a multiple of 8; a multiple of 128 when tiled.
    n_pad8 = _round_up(N, 8)
    if n_pad8 <= tn_target:
        tn, n_pad = n_pad8, n_pad8
    else:
        tn = tn_target
        n_pad = _round_up(N, tn)

    # M chunking (in-kernel loop). tm and m_pad are always multiples of 128.
    m_pad128 = _round_up(M, 128)
    if m_pad128 <= tm_target:
        tm, m_pad = m_pad128, m_pad128
    else:
        tm = tm_target
        m_pad = _round_up(M, tm)

    n_tiles = n_pad // tn
    n_chunks = m_pad // tm

    if n_pad != N:
        x = jnp.pad(x, ((0, 0), (0, 0), (0, n_pad - N)))
    if m_pad != M:
        y = jnp.pad(y, ((0, 0), (0, 0), (0, m_pad - M)))

    kernel = _make_chamfer_kernel(
        n_true=N, m_true=M, tn=tn, tm=tm, m_pad=m_pad, n_chunks=n_chunks,
        has_row_pad=(n_pad != N), has_col_pad=(m_pad != M))

    # TODO(synk): for very large M, switch y to memory_space=pl.ANY and manually
    # double-buffer M chunks with pltpu.make_async_copy instead of a resident block.
    per_batch = pl.pallas_call(
        kernel,
        out_shape=jax.ShapeDtypeStruct((B, 1, 1), jnp.float32),
        grid=(B, n_tiles),
        in_specs=[
            pl.BlockSpec((1, C, tn), lambda b, t: (b, 0, t)),       # x tile
            pl.BlockSpec((1, C, m_pad), lambda b, t: (b, 0, 0)),    # full y (no re-DMA per tile)
        ],
        out_specs=pl.BlockSpec((1, 1, 1), lambda b, t: (b, 0, 0)),
        scratch_shapes=[
            pltpu.VMEM((tn, 128), jnp.float32),   # x-side lane-group running min
            pltpu.VMEM((8, m_pad), jnp.float32),  # y-side sublane-slab running min
        ],
        compiler_params=pltpu.CompilerParams(
            dimension_semantics=("parallel", "arbitrary"),
            vmem_limit_bytes=vmem_limit_bytes,
        ),
    )(x, y)

    return jnp.mean(per_batch[:, 0, 0])


def chamfer_reference(x, y):
    """Plain-JAX replica of the PyTorch forward for verification."""
    d = jnp.sum((x[:, :, :, None] - y[:, :, None, :]) ** 2, axis=1)   # (B, N, M)
    min_for_each_x_i = jnp.min(d, axis=2)                             # (B, N)
    min_for_each_y_j = jnp.min(d, axis=1)                             # (B, M)
    dist = jnp.sum(min_for_each_x_i, axis=1) + jnp.sum(min_for_each_y_j, axis=1)
    return jnp.mean(dist, axis=0)


if __name__ == "__main__":
    key = jax.random.PRNGKey(0)
    k1, k2, k3, k4, k5, k6 = jax.random.split(key, 6)

    # Small shapes consistent with the module: batch=2, channels=4, N=16, M=8.
    B, C, N, M = 2, 4, 16, 8
    x = jax.random.normal(k1, (B, C, N), dtype=jnp.float32)
    y = jax.random.normal(k2, (B, C, M), dtype=jnp.float32)
    out = jax.block_until_ready(chamfer_distance(x, y))
    ref = jax.block_until_ready(chamfer_reference(x, y))
    assert out.shape == (), f"expected scalar, got {out.shape}"
    assert jnp.allclose(out, ref, rtol=1e-4, atol=1e-4), (out, ref)

    # Tiled path: 2 N-tiles, 2 M-chunks, row & col padding masks.
    B2, C2, N2, M2 = 2, 3, 200, 150
    x2 = jax.random.normal(k3, (B2, C2, N2), dtype=jnp.float32)
    y2 = jax.random.normal(k4, (B2, C2, M2), dtype=jnp.float32)
    out2 = jax.block_until_ready(
        chamfer_distance(x2, y2, tn_target=128, tm_target=128))
    ref2 = jax.block_until_ready(chamfer_reference(x2, y2))
    assert jnp.allclose(out2, ref2, rtol=1e-3, atol=1e-3), (out2, ref2)

    # Exercises the fori_loop chunk path (2 interior chunks) + peeled masked tail.
    B3, C3, N3, M3 = 1, 4, 256, 300
    x3 = jax.random.normal(k5, (B3, C3, N3), dtype=jnp.float32)
    y3 = jax.random.normal(k6, (B3, C3, M3), dtype=jnp.float32)
    out3 = jax.block_until_ready(
        chamfer_distance(x3, y3, tn_target=128, tm_target=128))
    ref3 = jax.block_until_ready(chamfer_reference(x3, y3))
    assert jnp.allclose(out3, ref3, rtol=1e-3, atol=1e-3), (out3, ref3)

    print("KERNEL_OK")
</pallas_src>

<mosaic_0001>
module attributes {stable_mosaic.version = 11 : i64} {
  func.func @kernel(%arg0: i32, %arg1: i32, %arg2: memref<1x4x16xf32, #tpu.memory_space<vmem>>, %arg3: memref<1x4x128xf32, #tpu.memory_space<vmem>>, %arg4: memref<1x1x1xf32, #tpu.memory_space<vmem>>, %arg5: memref<16x128xf32, #tpu.memory_space<vmem>>, %arg6: memref<8x128xf32, #tpu.memory_space<vmem>>) attributes {dimension_semantics = [#tpu.dimension_semantics<parallel>, #tpu.dimension_semantics<arbitrary>], iteration_bounds = array<i64: 2, 1>, scalar_prefetch = 0 : i64, scratch_operands = 2 : i64, tpu.core_type = #tpu.core_type<tc>, window_params = [{transform_indices = @transform_0, window_bounds = array<i64: 1, 4, 16>}, {transform_indices = @transform_1, window_bounds = array<i64: 1, 4, 128>}, {transform_indices = @transform_2, window_bounds = array<i64: 1, 1, 1>}]} {
    %c0_i32 = arith.constant 0 : i32
    %0 = arith.cmpi eq, %arg1, %c0_i32 : i32
    %1 = arith.extui %0 : i1 to i32
    %c0_i32_0 = arith.constant 0 : i32
    %2 = arith.cmpi ne, %1, %c0_i32_0 : i32
    scf.if %2 {
      %cst_36 = arith.constant 0.000000e+00 : f32
      %54 = vector.broadcast %cst_36 : f32 to vector<1x1x1xf32>
      %c0_37 = arith.constant 0 : index
      %c0_38 = arith.constant 0 : index
      %c0_39 = arith.constant 0 : index
      %55 = vector.load %arg4[%c0_37, %c0_38, %c0_39] : memref<1x1x1xf32, #tpu.memory_space<vmem>>, vector<1x1x1xf32>
      tpu.vector_store %arg4[%c0_37, %c0_38, %c0_39], %54 {strides = array<i32>} : memref<1x1x1xf32, #tpu.memory_space<vmem>>, vector<1x1x1xf32>,
      %cst_40 = arith.constant 0x7F800000 : f32
      %56 = vector.broadcast %cst_40 : f32 to vector<8x128xf32>
      %c0_41 = arith.constant 0 : index
      %c0_42 = arith.constant 0 : index
      %57 = vector.load %arg6[%c0_41, %c0_42] : memref<8x128xf32, #tpu.memory_space<vmem>>, vector<8x128xf32>
      tpu.vector_store %arg6[%c0_41, %c0_42], %56 {strides = array<i32>} : memref<8x128xf32, #tpu.memory_space<vmem>>, vector<8x128xf32>,
    } else {
    }
    %cst = arith.constant 0x7F800000 : f32
    %3 = vector.broadcast %cst : f32 to vector<16x128xf32>
    %c0 = arith.constant 0 : index
    %c0_1 = arith.constant 0 : index
    %4 = vector.load %arg5[%c0, %c0_1] : memref<16x128xf32, #tpu.memory_space<vmem>>, vector<16x128xf32>
    tpu.vector_store %arg5[%c0, %c0_1], %3 {strides = array<i32>} : memref<16x128xf32, #tpu.memory_space<vmem>>, vector<16x128xf32>,
    %c0_2 = arith.constant 0 : index
    %c0_3 = arith.constant 0 : index
    %c0_4 = arith.constant 0 : index
    %5 = vector.load %arg2[%c0_2, %c0_3, %c0_4] : memref<1x4x16xf32, #tpu.memory_space<vmem>>, vector<1x4x16xf32>
    %6 = vector.shape_cast %5 : vector<1x4x16xf32> to vector<4x16xf32>
    %cst_5 = arith.constant 1.000000e+00 : f32
    %7 = vector.broadcast %cst_5 : f32 to vector<4x1xf32>
    %8 = arith.mulf %6, %6 : vector<4x16xf32>
    %cst_6 = arith.constant dense<0.000000e+00> : vector<16x1xf32>
    %9 = tpu.matmul %8, %7, %cst_6 {dimension_numbers = #tpu.dot_dimension_numbers<[0], [0], [1], [1], [0, 1, 1, 1], [], []>} : vector<4x16xf32>, vector<4x1xf32>, vector<16x1xf32> -> vector<16x1xf32>
    %cst_7 = arith.constant -2.000000e+00 : f32
    %10 = vector.broadcast %cst_7 : f32 to vector<4x16xf32>
    %11 = arith.mulf %6, %10 : vector<4x16xf32>
    %c0_8 = arith.constant 0 : index
    %c0_9 = arith.constant 0 : index
    %c0_10 = arith.constant 0 : index
    %12 = vector.load %arg3[%c0_8, %c0_9, %c0_10] : memref<1x4x128xf32, #tpu.memory_space<vmem>>, vector<1x4x128xf32>
    %13 = vector.shape_cast %12 : vector<1x4x128xf32> to vector<4x128xf32>
    %14 = arith.mulf %13, %13 : vector<4x128xf32>
    %cst_11 = arith.constant dense<0.000000e+00> : vector<128xf32>
    %15 = vector.multi_reduction <add>, %14, %cst_11 [0] : vector<4x128xf32> to vector<128xf32>
    %16 = vector.shape_cast %15 : vector<128xf32> to vector<1x128xf32>
    %17 = tpu.iota {dimensions = array<i32: 1>} : vector<1x128xi32>
    %c0_i32_12 = arith.constant 0 : i32
    %18 = vector.broadcast %c0_i32_12 : i32 to vector<1x128xi32>
    %19 = arith.addi %18, %17 : vector<1x128xi32>
    %c8_i32 = arith.constant 8 : i32
    %20 = vector.broadcast %c8_i32 : i32 to vector<1x128xi32>
    %21 = arith.cmpi slt, %19, %20 : vector<1x128xi32>
    %cst_13 = arith.constant 0x7F800000 : f32
    %22 = vector.broadcast %cst_13 : f32 to vector<1x128xf32>
    %23 = arith.select %21, %16, %22 : vector<1x128xi1>, vector<1x128xf32>
    %cst_14 = arith.constant dense<0.000000e+00> : vector<16x128xf32>
    %24 = tpu.matmul %11, %13, %cst_14 {dimension_numbers = #tpu.dot_dimension_numbers<[0], [0], [1], [1], [0, 1, 1, 1], [], []>} : vector<4x16xf32>, vector<4x128xf32>, vector<16x128xf32> -> vector<16x128xf32>
    %25 = vector.broadcast %9 : vector<16x1xf32> to vector<16x128xf32>
    %26 = vector.broadcast %23 : vector<1x128xf32> to vector<16x128xf32>
    %27 = arith.addf %25, %26 : vector<16x128xf32>
    %28 = arith.addf %27, %24 : vector<16x128xf32>
    %c0_15 = arith.constant 0 : index
    %c0_16 = arith.constant 0 : index
    %29 = vector.load %arg5[%c0_15, %c0_16] : memref<16x128xf32, #tpu.memory_space<vmem>>, vector<16x128xf32>
    %30 = arith.minimumf %29, %28 : vector<16x128xf32>
    %c0_17 = arith.constant 0 : index
    %c0_18 = arith.constant 0 : index
    %31 = vector.load %arg5[%c0_17, %c0_18] : memref<16x128xf32, #tpu.memory_space<vmem>>, vector<16x128xf32>
    tpu.vector_store %arg5[%c0_17, %c0_18], %30 {strides = array<i32>} : memref<16x128xf32, #tpu.memory_space<vmem>>, vector<16x128xf32>,
    %c0_19 = arith.constant 0 : index
    %c0_20 = arith.constant 0 : index
    %32 = vector.load %arg6[%c0_19, %c0_20] : memref<8x128xf32, #tpu.memory_space<vmem>>, vector<8x128xf32>
    %33 = vector.extract_strided_slice %28 {offsets = [0, 0], sizes = [8, 128], strides = [1, 1]} : vector<16x128xf32> to vector<8x128xf32>
    %34 = arith.minimumf %32, %33 : vector<8x128xf32>
    %35 = vector.extract_strided_slice %28 {offsets = [8, 0], sizes = [8, 128], strides = [1, 1]} : vector<16x128xf32> to vector<8x128xf32>
    %36 = arith.minimumf %34, %35 : vector<8x128xf32>
    %c0_21 = arith.constant 0 : index
    %c0_22 = arith.constant 0 : index
    %37 = vector.load %arg6[%c0_21, %c0_22] : memref<8x128xf32, #tpu.memory_space<vmem>>, vector<8x128xf32>
    tpu.vector_store %arg6[%c0_21, %c0_22], %36 {strides = array<i32>} : memref<8x128xf32, #tpu.memory_space<vmem>>, vector<8x128xf32>,
    %c0_23 = arith.constant 0 : index
    %c0_24 = arith.constant 0 : index
    %38 = vector.load %arg5[%c0_23, %c0_24] : memref<16x128xf32, #tpu.memory_space<vmem>>, vector<16x128xf32>
    %cst_25 = arith.constant dense<0x7F800000> : vector<16xf32>
    %39 = vector.multi_reduction <minimumf>, %38, %cst_25 [1] : vector<16x128xf32> to vector<16xf32>
    %40 = vector.shape_cast %39 : vector<16xf32> to vector<16x1xf32>
    %cst_26 = arith.constant 0.000000e+00 : f32
    %41 = vector.broadcast %cst_26 : f32 to vector<16x1xf32>
    %42 = arith.maximumf %40, %41 : vector<16x1xf32>
    %c0_27 = arith.constant 0 : index
    %c0_28 = arith.constant 0 : index
    %c0_29 = arith.constant 0 : index
    %43 = vector.load %arg4[%c0_27, %c0_28, %c0_29] : memref<1x1x1xf32, #tpu.memory_space<vmem>>, vector<1x1x1xf32>
    %44 = vector.shape_cast %42 : vector<16x1xf32> to vector<1x16x1xf32>
    %cst_30 = arith.constant dense<0.000000e+00> : vector<1xf32>
    %45 = vector.multi_reduction <add>, %44, %cst_30 [1, 2] : vector<1x16x1xf32> to vector<1xf32>
    %46 = vector.shape_cast %45 : vector<1xf32> to vector<1x1x1xf32>
    %47 = vector.extract %46[0, 0, 0] : f32 from vector<1x1x1xf32>
    %48 = vector.broadcast %47 : f32 to vector<1x1x1xf32>
    %49 = arith.addf %43, %48 : vector<1x1x1xf32>
    %c0_31 = arith.constant 0 : index
    %c0_32 = arith.constant 0 : index
    %c0_33 = arith.constant 0 : index
    %50 = vector.load %arg4[%c0_31, %c0_32, %c0_33] : memref<1x1x1xf32, #tpu.memory_space<vmem>>, vector<1x1x1xf32>
    tpu.vector_store %arg4[%c0_31, %c0_32, %c0_33], %49 {strides = array<i32>} : memref<1x1x1xf32, #tpu.memory_space<vmem>>, vector<1x1x1xf32>,
    %c0_i32_34 = arith.constant 0 : i32
    %51 = arith.cmpi eq, %arg1, %c0_i32_34 : i32
    %52 = arith.extui %51 : i1 to i32
    %c0_i32_35 = arith.constant 0 : i32
    %53 = arith.cmpi ne, %52, %c0_i32_35 : i32
    scf.if %53 {
      %c0_36 = arith.constant 0 : index
      %c0_37 = arith.constant 0 : index
      %54 = vector.load %arg6[%c0_36, %c0_37] : memref<8x128xf32, #tpu.memory_space<vmem>>, vector<8x128xf32>
      %cst_38 = arith.constant dense<0x7F800000> : vector<128xf32>
      %55 = vector.multi_reduction <minimumf>, %54, %cst_38 [0] : vector<8x128xf32> to vector<128xf32>
      %56 = vector.shape_cast %55 : vector<128xf32> to vector<1x128xf32>
      %cst_39 = arith.constant 0.000000e+00 : f32
      %57 = vector.broadcast %cst_39 : f32 to vector<1x128xf32>
      %58 = arith.maximumf %56, %57 : vector<1x128xf32>
      %59 = tpu.iota {dimensions = array<i32: 1>} : vector<1x128xi32>
      %c8_i32_40 = arith.constant 8 : i32
      %60 = vector.broadcast %c8_i32_40 : i32 to vector<1x128xi32>
      %61 = arith.cmpi slt, %59, %60 : vector<1x128xi32>
      %cst_41 = arith.constant 0.000000e+00 : f32
      %62 = vector.broadcast %cst_41 : f32 to vector<1x128xf32>
      %63 = arith.select %61, %58, %62 : vector<1x128xi1>, vector<1x128xf32>
      %c0_42 = arith.constant 0 : index
      %c0_43 = arith.constant 0 : index
      %c0_44 = arith.constant 0 : index
      %64 = vector.load %arg4[%c0_42, %c0_43, %c0_44] : memref<1x1x1xf32, #tpu.memory_space<vmem>>, vector<1x1x1xf32>
      %65 = vector.shape_cast %63 : vector<1x128xf32> to vector<1x1x128xf32>
      %cst_45 = arith.constant dense<0.000000e+00> : vector<1xf32>
      %66 = vector.multi_reduction <add>, %65, %cst_45 [1, 2] : vector<1x1x128xf32> to vector<1xf32>
      %67 = vector.shape_cast %66 : vector<1xf32> to vector<1x1x1xf32>
      %68 = vector.extract %67[0, 0, 0] : f32 from vector<1x1x1xf32>
      %69 = vector.broadcast %68 : f32 to vector<1x1x1xf32>
      %70 = arith.addf %64, %69 : vector<1x1x1xf32>
      %c0_46 = arith.constant 0 : index
      %c0_47 = arith.constant 0 : index
      %c0_48 = arith.constant 0 : index
      %71 = vector.load %arg4[%c0_46, %c0_47, %c0_48] : memref<1x1x1xf32, #tpu.memory_space<vmem>>, vector<1x1x1xf32>
      tpu.vector_store %arg4[%c0_46, %c0_47, %c0_48], %70 {strides = array<i32>} : memref<1x1x1xf32, #tpu.memory_space<vmem>>, vector<1x1x1xf32>,
    } else {
    }
    return
  }
  func.func @transform_0(%arg0: i32, %arg1: i32) -> (i32, i32, i32) {
    %c0_i32 = arith.constant 0 : i32
    %c0_i32_0 = arith.constant 0 : i32
    return %arg0, %c0_i32, %arg1 : i32, i32, i32
  }
  func.func @transform_1(%arg0: i32, %arg1: i32) -> (i32, i32, i32) {
    %c0_i32 = arith.constant 0 : i32
    %c0_i32_0 = arith.constant 0 : i32
    %c0_i32_1 = arith.constant 0 : i32
    return %arg0, %c0_i32, %c0_i32_0 : i32, i32, i32
  }
  func.func @transform_2(%arg0: i32, %arg1: i32) -> (i32, i32, i32) {
    %c0_i32 = arith.constant 0 : i32
    %c0_i32_0 = arith.constant 0 : i32
    %c0_i32_1 = arith.constant 0 : i32
    return %arg0, %c0_i32, %c0_i32_0 : i32, i32, i32
  }
}

</mosaic_0001>

<llo_original>
// kernel: tpu_custom_call.1
$region0: #{tpu_custom_call.1}
  #allocation0 [shape = 'u32[]', space=smem, size = 0x4, offset = 0x4, fixed_abs, tag = 'smem constant byte address 0x4 - core index']
  #allocation1 [shape = 'u32[144,128]{1,0:T(1,128)}', space=vmem, size = 0x12000, scoped, tag = 'internal scratch']
  #allocation2 [shape = 'f32[16,128]{1,0:T(8,128)}', space=vmem, size = 0x2000, scoped, tag = 'scratch operand']
  #allocation3 [shape = 'f32[8,128]{1,0:T(8,128)}', space=vmem, size = 0x1000, scoped, tag = 'scratch operand']
  %s0 = inlined_call_operand.hbm [shape: f32[2,4,16], index: 0, kind: input, shape index: {}]
  %s1 = inlined_call_operand.hbm [shape: f32[2,4,128], index: 1, kind: input, shape index: {}]
  %s2 = inlined_call_operand.vmem [shape: f32[2,1,1], index: 2, kind: output, shape index: {}]
  %s3 = sld [smem:[#allocation0]]
  $region57: #{tpu_custom_call.1} parent=0
    _
  %s5 = ssub.s32 1, %s3
  %s6 = scalar_select 0, %s5, %s3
  $region1: #{tpu_custom_call.1} parent=0
    #allocation4 [shape = 'u8[4096]{0}', space=vmem, size = 0x1000, scoped, tag = 'input window, operand 0']
    #allocation5 [shape = 's32[2]{0}', space=sflag, size = 0x8, scoped, tag = 'scoped memory for tpu_custom_call.1']
    #allocation6 [shape = 'u8[4096]{0}', space=vmem, size = 0x1000, scoped, tag = 'input window, operand 1']
    #allocation7 [shape = 's32[2]{0}', space=sflag, size = 0x8, scoped, tag = 'scoped memory for tpu_custom_call.1']
    %7 = vsyncpa [#allocation5], 0
    %s8 = scalar_lea.sflag [#allocation5], 1
    %9 = vsyncpa %s8, 0
    %10 = vsyncpa [#allocation7], 0
    %s11 = scalar_lea.sflag [#allocation7], 1
    %12 = vsyncpa %s11, 0
    loop: start=0, step=1, limit=4
    $region2: #{tpu_custom_call.1} parent=1 // loop_pre_header
      _
    $region3: #{tpu_custom_call.1} parent=1 // loop_header
      %s14 = sphi 0, %s18
      %p15 = scmp.ge.s32.totalorder %s14, 4
      %s21 = sphi 0, %s33
      %s22 = sphi 0, %s29
      %s23 = sphi 0, %s21
      %s24 = sphi 0, %s22
      %s25 = sphi 0, %s23
      %s26 = sphi 0, %s24
      %s38 = sphi 0, %s40
      %s41 = sphi 0, %s38
      %s42 = sphi 0, %s41
      %s58 = sphi 0, %s42
      %s64 = sphi 0, %s66
      %s67 = sphi 0, %s64
      %s68 = sphi 0, %s67
      %s84 = sphi 0, %s68
      %s90 = sphi 0, %s92
      %s93 = sphi 0, %s90
      %s94 = sphi 0, %s93
      %s110 = sphi 0, %s94
    $region4: #{tpu_custom_call.1} parent=1 // loop_header_branch
      %17 = sbr.rel (%p15) target = $region8
    $region5: #{tpu_custom_call.1} parent=1 // loop_body
      %s19 = ssub.s32 %s14, 1
      %s20 = ssub.s32 %s14, 2
      %s27 = sadd.s32 1, %s22
      %p28 = scmp.ge.s32.totalorder %s27, 1
      %s29 = scalar_select %p28, 0, %s27
      %s30 = sadd.s32 1, %s21
      %s31 = scalar_select %p28, %s30, %s21
      %p32 = scmp.ge.s32.totalorder %s31, 2
      %s33 = scalar_select %p32, 0, %s31
      %s34 = ssub.s32 %s21, %s33
      %s35 = ssub.s32 %s22, %s29
      %s36 = sor.u32 %s34, %s35
      %p37 = scmp.eq.s32.totalorder %s36, 0
      %s39 = sadd.s32 %s38, 1
      %s40 = scalar_select %p37, %s38, %s39
      %p43 = pneg %p37
      %p44 = scmp.eq.s32.totalorder %s14, 1
      %p45 = por %p43, %p44
      %p46 = scmp.ne.s32.totalorder %s38, %s41
      %p47 = scmp.eq.s32.totalorder %s14, 0
      %p48 = por %p46, %p47
      %p49 = scmp.ne.s32.totalorder %s38, %s41
      %p50 = scmp.eq.s32.totalorder %s19, 1
      %p51 = por %p49, %p50
      %p52 = scmp.ne.s32.totalorder %s41, %s42
      %p53 = scmp.eq.s32.totalorder %s19, 0
      %p54 = por %p52, %p53
      %p55 = scmp.ne.s32.totalorder %s41, %s42
      %p56 = scmp.eq.s32.totalorder %s20, 1
      %p57 = por %p55, %p56
      %p59 = scmp.ne.s32.totalorder %s42, %s58
      %p60 = scmp.eq.s32.totalorder %s20, 0
      %p61 = por %p59, %p60
      %s62 = ssub.s32 %s21, %s33
      %p63 = scmp.eq.s32.totalorder %s62, 0
      %s65 = sadd.s32 %s64, 1
      %s66 = scalar_select %p63, %s64, %s65
      %p69 = pneg %p63
      %p70 = scmp.eq.s32.totalorder %s14, 1
      %p71 = por %p69, %p70
      %p72 = scmp.ne.s32.totalorder %s64, %s67
      %p73 = scmp.eq.s32.totalorder %s14, 0
      %p74 = por %p72, %p73
      %p75 = scmp.ne.s32.totalorder %s64, %s67
      %p76 = scmp.eq.s32.totalorder %s19, 1
      %p77 = por %p75, %p76
      %p78 = scmp.ne.s32.totalorder %s67, %s68
      %p79 = scmp.eq.s32.totalorder %s19, 0
      %p80 = por %p78, %p79
      %p81 = scmp.ne.s32.totalorder %s67, %s68
      %p82 = scmp.eq.s32.totalorder %s20, 1
      %p83 = por %p81, %p82
      %p85 = scmp.ne.s32.totalorder %s68, %s84
      %p86 = scmp.eq.s32.totalorder %s20, 0
      %p87 = por %p85, %p86
      %s88 = ssub.s32 %s21, %s33
      %p89 = scmp.eq.s32.totalorder %s88, 0
      %s91 = sadd.s32 %s90, 1
      %s92 = scalar_select %p89, %s90, %s91
      %p95 = pneg %p89
      %p96 = scmp.eq.s32.totalorder %s14, 1
      %p97 = por %p95, %p96
      %p98 = scmp.ne.s32.totalorder %s90, %s93
      %p99 = scmp.eq.s32.totalorder %s14, 0
      %p100 = por %p98, %p99
      %p101 = scmp.ne.s32.totalorder %s90, %s93
      %p102 = scmp.eq.s32.totalorder %s19, 1
      %p103 = por %p101, %p102
      %p104 = scmp.ne.s32.totalorder %s93, %s94
      %p105 = scmp.eq.s32.totalorder %s19, 0
      %p106 = por %p104, %p105
      %p107 = scmp.ne.s32.totalorder %s93, %s94
      %p108 = scmp.eq.s32.totalorder %s20, 1
      %p109 = por %p107, %p108
      %p111 = scmp.ne.s32.totalorder %s94, %s110
      %p112 = scmp.eq.s32.totalorder %s20, 0
      %p113 = por %p111, %p112
      %p114 = scmp.le.s32.totalorder 1, %s14
      %p115 = scmp.lt.s32.totalorder %s14, 3
      %p116 = pnand %p114, %p115
      %p117 = pneg %p116
      // Predicated region
      $region9: #{tpu_custom_call.1} parent=5 // pred_check
        _
      $region10: #{tpu_custom_call.1} parent=5 // pred_check_branch
        %119 = sbr.rel (%p116) target = $region12
      $region11: #{tpu_custom_call.1} parent=5 // pred_region
        %s120 = ssub.s32 %s14, 1
      $region12: #{tpu_custom_call.1} parent=5 // pred_fallthru
        _
      %p121 = scmp.lt.s32.totalorder %s14, 2
      // Predicated region
      $region13: #{tpu_custom_call.1} parent=5 // pred_check
        %p122 = pneg %p121
      $region14: #{tpu_custom_call.1} parent=5 // pred_check_branch
        %124 = sbr.rel (%p122) target = $region16
      $region15: #{tpu_custom_call.1} parent=5 // pred_region
        // Predicated region
        $region17: #{tpu_custom_call.1} parent=15 // pred_check
          %p125 = pneg %p48
        $region18: #{tpu_custom_call.1} parent=15 // pred_check_branch
          %127 = sbr.rel (%p125) target = $region20
        $region19: #{tpu_custom_call.1} parent=15 // pred_region
          %s128 = sand.u32 %s38, 1
          %s129 = scalar_lea.sflag [#allocation5], %s128
          %s130 = sand.u32 %s38, 1
          %s131 = smul.addr %s130, 4
          %s132 = scalar_lea.vmem [#allocation4], %s131
          %s134 = ssub.s32 64, 64
          %135 = vsyncadd %s129, %s134
          %s136 = sadd.s32 %s22, %s21
          %s137 = smul.addr %s136, 64
          %s138 = scalar_lea.hbm %s0, %s137
          %s140 = sshll.u32 %s132, 4
          %s141 = int_to_ptr.vmem [resolvable:$true] %s140
          %143 = dma.hbm_to_vmem [thread:$0]  %s138, 64, %s141, %s129
        $region20: #{tpu_custom_call.1} parent=15 // pred_fallthru
          _
        // Predicated region
        $region21: #{tpu_custom_call.1} parent=15 // pred_check
          %p144 = pneg %p74
        $region22: #{tpu_custom_call.1} parent=15 // pred_check_branch
          %146 = sbr.rel (%p144) target = $region24
        $region23: #{tpu_custom_call.1} parent=15 // pred_region
          %s147 = sand.u32 %s64, 1
          %s148 = scalar_lea.sflag [#allocation7], %s147
          %s149 = sand.u32 %s64, 1
          %s150 = smul.addr %s149, 4
          %s151 = scalar_lea.vmem [#allocation6], %s150
          %s153 = ssub.s32 64, 64
          %154 = vsyncadd %s148, %s153
          %s155 = smul.addr %s21, 64
          %s156 = scalar_lea.hbm %s1, %s155
          %s158 = sshll.u32 %s151, 4
          %s159 = int_to_ptr.vmem [resolvable:$true] %s158
          %161 = dma.hbm_to_vmem [thread:$0]  %s156, 64, %s159, %s148
        $region24: #{tpu_custom_call.1} parent=15 // pred_fallthru
          _
      $region16: #{tpu_custom_call.1} parent=5 // pred_fallthru
        _
      %p162 = scmp.le.s32.totalorder 1, %s14
      %p163 = scmp.lt.s32.totalorder %s14, 3
      %p164 = pnand %p162, %p163
      %p165 = pneg %p164
      // Predicated region
      $region25: #{tpu_custom_call.1} parent=5 // pred_check
        _
      $region26: #{tpu_custom_call.1} parent=5 // pred_check_branch
        %167 = sbr.rel (%p164) target = $region28
      $region27: #{tpu_custom_call.1} parent=5 // pred_region
        %s168 = ssub.s32 %s14, 1
        %s169 = sand.u32 %s41, 1
        %s170 = scalar_lea.sflag [#allocation5], %s169
        %s171 = sand.u32 %s41, 1
        %s172 = smul.addr %s171, 4
        %s173 = scalar_lea.vmem [#allocation4], %s172
        // Predicated region
        $region29: #{tpu_custom_call.1} parent=27 // pred_check
          %p174 = pneg %p54
        $region30: #{tpu_custom_call.1} parent=27 // pred_check_branch
          %176 = sbr.rel (%p174) target = $region32
        $region31: #{tpu_custom_call.1} parent=27 // pred_region
          %177 = dma.done %s170, 64
        $region32: #{tpu_custom_call.1} parent=27 // pred_fallthru
          _
        %s178 = sand.u32 %s67, 1
        %s179 = scalar_lea.sflag [#allocation7], %s178
        %s180 = sand.u32 %s67, 1
        %s181 = smul.addr %s180, 4
        %s182 = scalar_lea.vmem [#allocation6], %s181
        // Predicated region
        $region33: #{tpu_custom_call.1} parent=27 // pred_check
          %p183 = pneg %p80
        $region34: #{tpu_custom_call.1} parent=27 // pred_check_branch
          %185 = sbr.rel (%p183) target = $region36
        $region35: #{tpu_custom_call.1} parent=27 // pred_region
          %186 = dma.done %s179, 64
        $region36: #{tpu_custom_call.1} parent=27 // pred_fallthru
          _
        %s187 = sand.u32 %s41, 1
        %s188 = scalar_lea.sflag [#allocation5], %s187
        %s189 = sand.u32 %s41, 1
        %s190 = smul.addr %s189, 4
        %s191 = scalar_lea.vmem [#allocation4], %s190
        %p192 = pneg %p54
        %p193 = pneg %p51
        %s194 = sand.u32 %s67, 1
        %s195 = scalar_lea.sflag [#allocation7], %s194
        %s196 = sand.u32 %s67, 1
        %s197 = smul.addr %s196, 4
        %s198 = scalar_lea.vmem [#allocation6], %s197
        %p199 = pneg %p80
        %p200 = pneg %p77
        %p201 = pneg %p106
        %p202 = pneg %p103
        %p203 = scmp.lt.s32.totalorder %s23, 1
        %s204 = scalar_select %p203, %s23, 1
        %s205 = scalar_lea.vmem %s2, %s204
        %p206 = scmp.lt.s32.totalorder %s23, 1
        %s207 = scalar_select %p206, %s23, 1
        %s208 = scalar_lea.vmem %s2, %s207
        %p209 = scmp.eq.s32.totalorder %s24, 0
        // Predicated region
        $region37: #{tpu_custom_call.1} parent=27 // pred_check
          %p210 = pneg %p209
        $region38: #{tpu_custom_call.1} parent=27 // pred_check_branch
          %212 = sbr.rel (%p210) target = $region40
        $region39: #{tpu_custom_call.1} parent=27 // pred_region
          %vm213 = vcmask 0
          %214 = vst.msk [vmem:[%s208] sm:$0x1] %vm213, 0.0
          %215 = vst [vmem:[#allocation3] sm:$0xff] inf
        $region40: #{tpu_custom_call.1} parent=27 // pred_fallthru
          _
        %216 = vst [vmem:[#allocation2] sm:$0xff] inf
        %217 = vst [vmem:[#allocation2 + $0x8] sm:$0xff] inf
        %v218 = vld [vmem:[%s173] sm:$0xf]
        %v219 = vmul.f32 %v218, %v218
        %220 = vxpose.xlu0.b32.start [1/16] %v219, 128
        %221 = vxpose.xlu0.b32.cont [2/16] 0.0, 128
        %222 = vxpose.xlu0.b32.cont [3/16] 0.0, 128
        %223 = vxpose.xlu0.b32.cont [4/16] 0.0, 128
        %224 = vxpose.xlu0.b32.cont [5/16] 0.0, 128
        %225 = vxpose.xlu0.b32.cont [6/16] 0.0, 128
        %226 = vxpose.xlu0.b32.cont [7/16] 0.0, 128
        %227 = vxpose.xlu0.b32.cont [8/16] 0.0, 128
        %228 = vxpose.xlu0.b32.cont [9/16] 0.0, 128
        %229 = vxpose.xlu0.b32.cont [10/16] 0.0, 128
        %230 = vxpose.xlu0.b32.cont [11/16] 0.0, 128
        %231 = vxpose.xlu0.b32.cont [12/16] 0.0, 128
        %232 = vxpose.xlu0.b32.cont [13/16] 0.0, 128
        %233 = vxpose.xlu0.b32.cont [14/16] 0.0, 128
        %234 = vxpose.xlu0.b32.cont [15/16] 0.0, 128
        %235 = vxpose.xlu0.b32.end [16/16] 0.0, 128
        %v236 = vpop.trf.xlu0
        %v237 = vpop.trf.xlu0
        %v238 = vpop.trf.xlu0
        %v239 = vpop.trf.xlu0
        %v240 = vpop.trf.xlu0
        %v241 = vpop.trf.xlu0
        %v242 = vpop.trf.xlu0
        %v243 = vpop.trf.xlu0
        %v244 = vpop.trf.xlu0
        %v245 = vpop.trf.xlu0
        %v246 = vpop.trf.xlu0
        %v247 = vpop.trf.xlu0
        %v248 = vpop.trf.xlu0
        %v249 = vpop.trf.xlu0
        %v250 = vpop.trf.xlu0
        %v251 = vpop.trf.xlu0
        %vm252 = vcmask 31744
        %v254 = vsel %vm252, %v236, 0
        %v257 = vsel %vm252, %v237, 0
        %vm259 = vcmask 1043456
        %v261 = vsel %vm259, 1.0, 0
        %263 = vmatprep.subr.mxu0 0.0
        %264 = vmatpush1.msra.mxu0 %v261
        %265 = vmatprep.subr.mxu0 0.0
        %266 = vmatpush1.msra.mxu0 0.0
        %267 = vmatprep.subr.mxu0 0.0
        %268 = vmatpush1.msra.mxu0 0.0
        %269 = vmatprep.subr.mxu0 0.0
        %270 = vmatpush1.msra.mxu0 0.0
        %271 = vmatprep.subr.mxu0 0.0
        %272 = vmatpush1.msra.mxu0 0.0
        %273 = vmatprep.subr.mxu0 0.0
        %274 = vmatpush1.msra.mxu0 0.0
        %275 = vmatprep.subr.mxu0 0.0
        %276 = vmatpush1.msra.mxu0 0.0
        %277 = vmatprep.subr.mxu0 0.0
        %278 = vmatpush1.msra.mxu0 0.0
        %279 = vmatprep.subr.mxu0 0.0
        %280 = vmatpush1.msra.mxu0 0.0
        %281 = vmatprep.subr.mxu0 0.0
        %282 = vmatpush1.msra.mxu0 0.0
        %283 = vmatprep.subr.mxu0 0.0
        %284 = vmatpush1.msra.mxu0 0.0
        %285 = vmatprep.subr.mxu0 0.0
        %286 = vmatpush1.msra.mxu0 0.0
        %287 = vmatprep.subr.mxu0 0.0
        %288 = vmatpush1.msra.mxu0 0.0
        %289 = vmatprep.subr.mxu0 0.0
        %290 = vmatpush1.msra.mxu0 0.0
        %291 = vmatprep.subr.mxu0 0.0
        %292 = vmatpush1.msra.mxu0 0.0
        %293 = vmatprep.subr.mxu0 0.0
        %294 = vmatpush1.msra.mxu0 0.0
        %295 = vmatprep.subr.mxu0 0.0
        %296 = vmatpush1.msra.mxu0 0.0
        %297 = vmatprep.subr.mxu0 0.0
        %298 = vmatpush1.msra.mxu0 0.0
        %299 = vmatprep.subr.mxu0 0.0
        %300 = vmatpush1.msra.mxu0 0.0
        %301 = vmatprep.subr.mxu0 0.0
        %302 = vmatpush1.msra.mxu0 0.0
        %303 = vmatprep.subr.mxu0 0.0
        %304 = vmatpush1.msra.mxu0 0.0
        %305 = vmatprep.subr.mxu0 0.0
        %306 = vmatpush1.msra.mxu0 0.0
        %307 = vmatprep.subr.mxu0 0.0
        %308 = vmatpush1.msra.mxu0 0.0
        %309 = vmatprep.subr.mxu0 0.0
        %310 = vmatpush1.msra.mxu0 0.0
        %311 = vmatprep.subr.mxu0 0.0
        %312 = vmatpush1.msra.mxu0 0.0
        %313 = vmatprep.subr.mxu0 0.0
        %314 = vmatpush1.msra.mxu0 0.0
        %315 = vmatprep.subr.mxu0 0.0
        %316 = vmatpush1.msra.mxu0 0.0
        %317 = vmatprep.subr.mxu0 0.0
        %318 = vmatpush1.msra.mxu0 0.0
        %319 = vmatprep.subr.mxu0 0.0
        %320 = vmatpush1.msra.mxu0 0.0
        %321 = vmatprep.subr.mxu0 0.0
        %322 = vmatpush1.msra.mxu0 0.0
        %323 = vmatprep.subr.mxu0 0.0
        %324 = vmatpush1.msra.mxu0 0.0
        %325 = vmatprep.subr.mxu0 0.0
        %326 = vmatpush1.msra.mxu0 0.0
        %327 = vmatprep.mubr.f32.mxu0 0.0
        %328 = vmatmul.mubr.f32.gmra.mrb[0].mxu0 %v254
        %v329 = vpop.f32.mrb[0].mxu0
        %v330 = vadd.f32 0.0, %v329
        %v331 = vpop.f32.mrb[0].mxu0
        %332 = vmatprep.mubr.f32.mxu0 0.0
        %333 = vmatmul.mubr.f32.gmra.mrb[0].mxu0 %v257
        %v334 = vpop.f32.mrb[0].mxu0
        %v335 = vadd.f32 0.0, %v334
        %v336 = vpop.f32.mrb[0].mxu0
        %337 = vdwg.mxu0
        %v338 = vmul.f32 %v218, -2.0
        %v339 = vld [vmem:[%s182] sm:$0xf]
        %v340 = vmul.f32 %v339, %v339
        %v341 = vsel %vm259, %v340, 0.0
        %v342 = vrot.slane %v341, 4
        %v343 = vadd.f32 %v341, %v342
        %v344 = vrot.slane %v343, 2
        %v345 = vadd.f32 %v343, %v344
        %v346 = vrot.slane %v345, 1
        %v347 = vadd.f32 %v345, %v346
        %v348 = vlaneseq
        %v349 = vand.u32 %v348, 127
        %vm350 = vcmp.lt.s32.totalorder %v349, 8
        %v351 = vsel %vm350, %v347, inf
        %352 = vxpose.xlu0.b32.start [1/16] %v338, 128
        %353 = vxpose.xlu0.b32.cont [2/16] 0.0, 128
        %354 = vxpose.xlu0.b32.cont [3/16] 0.0, 128
        %355 = vxpose.xlu0.b32.cont [4/16] 0.0, 128
        %356 = vxpose.xlu0.b32.cont [5/16] 0.0, 128
        %357 = vxpose.xlu0.b32.cont [6/16] 0.0, 128
        %358 = vxpose.xlu0.b32.cont [7/16] 0.0, 128
        %359 = vxpose.xlu0.b32.cont [8/16] 0.0, 128
        %360 = vxpose.xlu0.b32.cont [9/16] 0.0, 128
        %361 = vxpose.xlu0.b32.cont [10/16] 0.0, 128
        %362 = vxpose.xlu0.b32.cont [11/16] 0.0, 128
        %363 = vxpose.xlu0.b32.cont [12/16] 0.0, 128
        %364 = vxpose.xlu0.b32.cont [13/16] 0.0, 128
        %365 = vxpose.xlu0.b32.cont [14/16] 0.0, 128
        %366 = vxpose.xlu0.b32.cont [15/16] 0.0, 128
        %367 = vxpose.xlu0.b32.end [16/16] 0.0, 128
        %v368 = vpop.trf.xlu0
        %v369 = vpop.trf.xlu0
        %v370 = vpop.trf.xlu0
        %v371 = vpop.trf.xlu0
        %v372 = vpop.trf.xlu0
        %v373 = vpop.trf.xlu0
        %v374 = vpop.trf.xlu0
        %v375 = vpop.trf.xlu0
        %v376 = vpop.trf.xlu0
        %v377 = vpop.trf.xlu0
        %v378 = vpop.trf.xlu0
        %v379 = vpop.trf.xlu0
        %v380 = vpop.trf.xlu0
        %v381 = vpop.trf.xlu0
        %v382 = vpop.trf.xlu0
        %v383 = vpop.trf.xlu0
        %v385 = vsel %vm252, %v368, 0
        %v388 = vsel %vm252, %v369, 0
        %v391 = vsel %vm259, %v339, 0
        %393 = vmatprep.subr.mxu0 0.0
        %394 = vmatpush1.msra.mxu0 %v391
        %395 = vmatprep.subr.mxu0 0.0
        %396 = vmatpush1.msra.mxu0 0.0
        %397 = vmatprep.subr.mxu0 0.0
        %398 = vmatpush1.msra.mxu0 0.0
        %399 = vmatprep.subr.mxu0 0.0
        %400 = vmatpush1.msra.mxu0 0.0
        %401 = vmatprep.subr.mxu0 0.0
        %402 = vmatpush1.msra.mxu0 0.0
        %403 = vmatprep.subr.mxu0 0.0
        %404 = vmatpush1.msra.mxu0 0.0
        %405 = vmatprep.subr.mxu0 0.0
        %406 = vmatpush1.msra.mxu0 0.0
        %407 = vmatprep.subr.mxu0 0.0
        %408 = vmatpush1.msra.mxu0 0.0
        %409 = vmatprep.subr.mxu0 0.0
        %410 = vmatpush1.msra.mxu0 0.0
        %411 = vmatprep.subr.mxu0 0.0
        %412 = vmatpush1.msra.mxu0 0.0
        %413 = vmatprep.subr.mxu0 0.0
        %414 = vmatpush1.msra.mxu0 0.0
        %415 = vmatprep.subr.mxu0 0.0
        %416 = vmatpush1.msra.mxu0 0.0
        %417 = vmatprep.subr.mxu0 0.0
        %418 = vmatpush1.msra.mxu0 0.0
        %419 = vmatprep.subr.mxu0 0.0
        %420 = vmatpush1.msra.mxu0 0.0
        %421 = vmatprep.subr.mxu0 0.0
        %422 = vmatpush1.msra.mxu0 0.0
        %423 = vmatprep.subr.mxu0 0.0
        %424 = vmatpush1.msra.mxu0 0.0
        %425 = vmatprep.subr.mxu0 0.0
        %426 = vmatpush1.msra.mxu0 0.0
        %427 = vmatprep.subr.mxu0 0.0
        %428 = vmatpush1.msra.mxu0 0.0
        %429 = vmatprep.subr.mxu0 0.0
        %430 = vmatpush1.msra.mxu0 0.0
        %431 = vmatprep.subr.mxu0 0.0
        %432 = vmatpush1.msra.mxu0 0.0
        %433 = vmatprep.subr.mxu0 0.0
        %434 = vmatpush1.msra.mxu0 0.0
        %435 = vmatprep.subr.mxu0 0.0
        %436 = vmatpush1.msra.mxu0 0.0
        %437 = vmatprep.subr.mxu0 0.0
        %438 = vmatpush1.msra.mxu0 0.0
        %439 = vmatprep.subr.mxu0 0.0
        %440 = vmatpush1.msra.mxu0 0.0
        %441 = vmatprep.subr.mxu0 0.0
        %442 = vmatpush1.msra.mxu0 0.0
        %443 = vmatprep.subr.mxu0 0.0
        %444 = vmatpush1.msra.mxu0 0.0
        %445 = vmatprep.subr.mxu0 0.0
        %446 = vmatpush1.msra.mxu0 0.0
        %447 = vmatprep.subr.mxu0 0.0
        %448 = vmatpush1.msra.mxu0 0.0
        %449 = vmatprep.subr.mxu0 0.0
        %450 = vmatpush1.msra.mxu0 0.0
        %451 = vmatprep.subr.mxu0 0.0
        %452 = vmatpush1.msra.mxu0 0.0
        %453 = vmatprep.subr.mxu0 0.0
        %454 = vmatpush1.msra.mxu0 0.0
        %455 = vmatprep.subr.mxu0 0.0
        %456 = vmatpush1.msra.mxu0 0.0
        %457 = vmatprep.mubr.f32.mxu0 0.0
        %458 = vmatmul.mubr.f32.gmra.mrb[0].mxu0 %v385
        %v459 = vpop.f32.mrb[0].mxu0
        %v460 = vadd.f32 0.0, %v459
        %v461 = vpop.f32.mrb[0].mxu0
        %462 = vmatprep.mubr.f32.mxu0 0.0
        %463 = vmatmul.mubr.f32.gmra.mrb[0].mxu0 %v388
        %v464 = vpop.f32.mrb[0].mxu0
        %v465 = vadd.f32 0.0, %v464
        %v466 = vpop.f32.mrb[0].mxu0
        %467 = vdwg.mxu0
        %469 = vset.pattern.permute.xlu0 0
        %470 = vperm.xlu0 %469, %v330
        %v471 = vpop.permute.xlu0 %470
        %474 = vset.pattern.permute.xlu0 0
        %475 = vperm.xlu0 %474, %v335
        %v476 = vpop.permute.xlu0 %475
        %v478 = vadd.f32 %v471, %v351
        %v479 = vadd.f32 %v476, %v351
        %v480 = vadd.f32 %v478, %v460
        %v481 = vadd.f32 %v479, %v465
        %v482 = vld [vmem:[#allocation2] sm:$0xff]
        %v483 = vld [vmem:[#allocation2 + $0x8] sm:$0xff]
        %v484 = vmin.f32 %v482, %v480
        %v485 = vmin.f32 %v483, %v481
        %486 = vst [vmem:[#allocation2] sm:$0xff] %v484
        %487 = vst [vmem:[#allocation2 + $0x8] sm:$0xff] %v485
        %v488 = vld [vmem:[#allocation3] sm:$0xff]
        %v489 = vmin.f32 %v488, %v480
        %v490 = vmin.f32 %v489, %v481
        %491 = vst [vmem:[#allocation3] sm:$0xff] %v490
        %v492 = vld [vmem:[#allocation2] sm:$0xff]
        %v493 = vld [vmem:[#allocation2 + $0x8] sm:$0xff]
        %494 = vmin.xlane.f32.xlu0 %v492
        %v495 = vpop.xlane.xlu0 %494
        %496 = vmin.xlane.f32.xlu0 %v493
        %v497 = vpop.xlane.xlu0 %496
        %v498 = vmax.f32 %v495, 0.0
        %v499 = vmax.f32 %v497, 0.0
        %v500 = vld [vmem:[%s208] sm:$0x1]
        %vm501 = vcmask 7168
        %v502 = vsel %vm501, %v498, 0.0
        %v503 = vsel %vm501, %v499, 0.0
        %v504 = vadd.f32 %v502, %v503
        %505 = vadd.xlane.f32.xlu0 %v504
        %v506 = vpop.xlane.xlu0 %505
        %v507 = vrot.slane %v506, 4
        %v508 = vadd.f32 %v506, %v507
        %v509 = vrot.slane %v508, 2
        %v510 = vadd.f32 %v508, %v509
        %v511 = vrot.slane %v510, 1
        %v512 = vadd.f32 %v510, %v511
        %s513 = vtos %v512
        %v514 = vstv %s513
        %v515 = vadd.f32 %v500, %v514
        %vm516 = vcmask 0
        %517 = vst.msk [vmem:[%s208] sm:$0x1] %vm516, %v515
        // Predicated region
        $region41: #{tpu_custom_call.1} parent=27 // pred_check
          %p518 = pneg %p209
        $region42: #{tpu_custom_call.1} parent=27 // pred_check_branch
          %520 = sbr.rel (%p518) target = $region44
        $region43: #{tpu_custom_call.1} parent=27 // pred_region
          %v521 = vld [vmem:[#allocation3] sm:$0xff]
          %v522 = vrot.slane %v521, 4
          %v523 = vmin.f32 %v521, %v522
          %v524 = vrot.slane %v523, 2
          %v525 = vmin.f32 %v523, %v524
          %v526 = vrot.slane %v525, 1
          %v527 = vmin.f32 %v525, %v526
          %v528 = vmax.f32 %v527, 0.0
          %v529 = vsel %vm350, %v528, 0.0
          %v530 = vld [vmem:[%s208] sm:$0x1]
          %vm531 = vcmask 1040384
          %v532 = vsel %vm531, %v529, 0.0
          %533 = vadd.xlane.f32.xlu0 %v532
          %v534 = vpop.xlane.xlu0 %533
          %v535 = vrot.slane %v534, 4
          %v536 = vadd.f32 %v534, %v535
          %v537 = vrot.slane %v536, 2
          %v538 = vadd.f32 %v536, %v537
          %v539 = vrot.slane %v538, 1
          %v540 = vadd.f32 %v538, %v539
          %s541 = vtos %v540
          %v542 = vstv %s541
          %v543 = vadd.f32 %v530, %v542
          %544 = vst.msk [vmem:[%s208] sm:$0x1] %vm516, %v543
        $region44: #{tpu_custom_call.1} parent=27 // pred_fallthru
          _
        %p545 = scmp.lt.s32.totalorder %s23, 1
        %s546 = scalar_select %p545, %s23, 1
        %s547 = scalar_lea.vmem %s2, %s546
        // Predicated region
        $region45: #{tpu_custom_call.1} parent=27 // pred_check
          %p548 = pneg %p103
        $region46: #{tpu_custom_call.1} parent=27 // pred_check_branch
          %550 = sbr.rel (%p548) target = $region48
        $region47: #{tpu_custom_call.1} parent=27 // pred_region
          _
        $region48: #{tpu_custom_call.1} parent=27 // pred_fallthru
          _
      $region28: #{tpu_custom_call.1} parent=5 // pred_fallthru
        _
      %p551 = scmp.le.s32.totalorder 2, %s14
      // Predicated region
      $region49: #{tpu_custom_call.1} parent=5 // pred_check
        %p552 = pneg %p551
      $region50: #{tpu_custom_call.1} parent=5 // pred_check_branch
        %554 = sbr.rel (%p552) target = $region52
      $region51: #{tpu_custom_call.1} parent=5 // pred_region
        %s555 = ssub.s32 %s14, 2
        // Predicated region
        $region53: #{tpu_custom_call.1} parent=51 // pred_check
          %p556 = pneg %p109
        $region54: #{tpu_custom_call.1} parent=51 // pred_check_branch
          %558 = sbr.rel (%p556) target = $region56
        $region55: #{tpu_custom_call.1} parent=51 // pred_region
          %p559 = scmp.lt.s32.totalorder %s25, 1
          %s560 = scalar_select %p559, %s25, 1
          %s561 = scalar_lea.vmem %s2, %s560
        $region56: #{tpu_custom_call.1} parent=51 // pred_fallthru
          _
      $region52: #{tpu_custom_call.1} parent=5 // pred_fallthru
        _
    $region6: #{tpu_custom_call.1} parent=1 // loop_footer
      %s18 = sadd.s32 1, %s14
    $region7: #{tpu_custom_call.1} parent=1 // loop_footer_branch
      %13 = sbr.rel target = $region3
    $region8: #{tpu_custom_call.1} parent=1 // loop_exit
      _
    %562 = vsyncpa [#allocation5], 1
    %s563 = scalar_lea.sflag [#allocation5], 1
    %564 = vsyncpa %s563, 1
    %565 = vsyncpa [#allocation7], 1
    %s566 = scalar_lea.sflag [#allocation7], 1
    %567 = vsyncpa %s566, 1

</llo_original>
